<compile_context>
chip_gen: v5e
topology: v5e:2x2
jax: 0.10.0
libtpu: 0.0.40
codegen_flags: <defaults>
</compile_context>

<pallas_src>
import jax
import jax.numpy as jnp
from jax.experimental import pallas as pl
from jax.experimental.pallas import tpu as pltpu

_TARGET_BLOCK_BYTES = 2 * 1024 * 1024  # ~2 MiB per-array tile


def _fuse_kernel(params_ref,
                 s0_ref, s1_ref, s2_ref, s3_ref, s4_ref,
                 yf_ref, yc_ref):
    # Dense (blk_rows, lane) tiles, one per side map.
    x0 = s0_ref[...]
    x1 = s1_ref[...]
    x2 = s2_ref[...]
    x3 = s3_ref[...]
    x4 = s4_ref[...]

    # Packed scalars from SMEM: [wf0..wf3, bf, wc0..wc3, bc]
    wf0 = params_ref[0]
    wf1 = params_ref[1]
    wf2 = params_ref[2]
    wf3 = params_ref[3]
    bf = params_ref[4]
    wc0 = params_ref[5]
    wc1 = params_ref[6]
    wc2 = params_ref[7]
    wc3 = params_ref[8]
    bc = params_ref[9]

    # fine   = w_fine   . sides[0..3] + b_fine
    # coarse = w_coarse . sides[1..4] + b_coarse
    yf_ref[...] = wf0 * x0 + wf1 * x1 + wf2 * x2 + wf3 * x3 + bf
    yc_ref[...] = wc0 * x1 + wc1 * x2 + wc2 * x3 + wc3 * x4 + bc


def _round_up(x, m):
    return -(-x // m) * m


def _cobnet_fuse_impl(sides, w_fine, b_fine, w_coarse, b_coarse):
    """sides: list of 5 arrays, each (N, 1, H, W) float32 (NCHW, like PyTorch).
    w_fine, w_coarse: (4,) float32 (squeezed 1x1 conv weights).
    b_fine, b_coarse: (1,) float32.
    Returns (y_fine, y_coarse), each (N, 1, H, W)."""
    assert len(sides) == 5
    N, C1, H, W = sides[0].shape
    assert C1 == 1
    P = N * H * W

    # Pick a copy-free lane-dense 2D view of the flattened pixel axis.
    if P % 128 == 0:
        lane = 128            # fully lane-dense vregs, contiguous block DMAs
        rows = P // 128
    else:
        lane = W              # block last dim == full array dim -> always legal
        rows = N * H

    # Per-row VMEM footprint (lane padded to a multiple of 128 inside VMEM).
    row_vmem_bytes = _round_up(lane, 128) * 4

    # Block rows: ~2 MiB tiles, multiple of 8, and at least 2 grid steps
    # whenever possible so the "parallel" axis can use both v7x TensorCores.
    if rows <= 8:
        blk_rows = rows                      # block == full sublane extent
    else:
        max_rows = max(8, (_TARGET_BLOCK_BYTES // row_vmem_bytes) // 8 * 8)
        half = _round_up((rows + 1) // 2, 8)  # ~half the rows, rounded to 8
        blk_rows = max(8, min(max_rows, half))

    grid = (pl.cdiv(rows, blk_rows),)

    # Pack all conv scalars into one SMEM operand: [wf(4), bf(1), wc(4), bc(1)].
    params = jnp.concatenate([
        jnp.asarray(w_fine, jnp.float32).reshape(-1),
        jnp.asarray(b_fine, jnp.float32).reshape(-1),
        jnp.asarray(w_coarse, jnp.float32).reshape(-1),
        jnp.asarray(b_coarse, jnp.float32).reshape(-1),
    ])

    xs = [s.astype(jnp.float32).reshape(rows, lane) for s in sides]

    tile_spec = pl.BlockSpec((blk_rows, lane), lambda i: (i, 0))
    smem_spec = pl.BlockSpec(memory_space=pltpu.SMEM)

    yf2d, yc2d = pl.pallas_call(
        _fuse_kernel,
        out_shape=(jax.ShapeDtypeStruct((rows, lane), jnp.float32),
                   jax.ShapeDtypeStruct((rows, lane), jnp.float32)),
        grid=grid,
        in_specs=[smem_spec,                       # packed scalars (10,)
                  tile_spec, tile_spec, tile_spec, tile_spec, tile_spec],
        out_specs=(tile_spec, tile_spec),
        compiler_params=pltpu.CompilerParams(
            dimension_semantics=("parallel",),
            vmem_limit_bytes=32 * 1024 * 1024),
        cost_estimate=pl.CostEstimate(
            flops=16 * P, transcendentals=0,
            bytes_accessed=7 * P * 4 + 10 * 4),
    )(params, *xs)

    y_fine = yf2d.reshape(N, 1, H, W)
    y_coarse = yc2d.reshape(N, 1, H, W)
    return y_fine, y_coarse


# jit the whole wrapper so the (free) reshapes / param concat fuse with the
# pallas_call instead of materializing extra HBM copies.
cobnet_fuse = jax.jit(_cobnet_fuse_impl)


if __name__ == "__main__":
    key = jax.random.PRNGKey(0)
    N, H, W = 2, 16, 16
    n_sides_input = 5  # forward uses sides[:4] and sides[1:] => 5 side maps

    # Deterministic parameter init (matches nn.init: weight ~ N(0, 0.01), bias = 0)
    kf, kc, *ks = jax.random.split(key, 2 + n_sides_input)
    w_fine = 0.01 * jax.random.normal(kf, (4,), dtype=jnp.float32)
    w_coarse = 0.01 * jax.random.normal(kc, (4,), dtype=jnp.float32)
    b_fine = jnp.zeros((1,), dtype=jnp.float32)
    b_coarse = jnp.zeros((1,), dtype=jnp.float32)

    # Deterministic example inputs: 5 side activations, (N, 1, H, W) each (NCHW)
    sides = [jax.random.normal(k, (N, 1, H, W), dtype=jnp.float32) for k in ks]

    y_fine, y_coarse = cobnet_fuse(sides, w_fine, b_fine, w_coarse, b_coarse)
    jax.block_until_ready((y_fine, y_coarse))

    # Pure-JAX reference (1x1 conv == channel-weighted sum + bias)
    x_fine = jnp.concatenate(sides[:4], axis=1)    # (N, 4, H, W)
    x_coarse = jnp.concatenate(sides[1:], axis=1)  # (N, 4, H, W)
    ref_fine = jnp.tensordot(w_fine, x_fine, axes=([0], [1]))[:, None] + b_fine[0]
    ref_coarse = jnp.tensordot(w_coarse, x_coarse, axes=([0], [1]))[:, None] + b_coarse[0]

    assert y_fine.shape == (N, 1, H, W) and y_coarse.shape == (N, 1, H, W)
    assert jnp.allclose(y_fine, ref_fine, atol=1e-6)
    assert jnp.allclose(y_coarse, ref_coarse, atol=1e-6)
    print("KERNEL_OK")
</pallas_src>

<mosaic_0001>
module attributes {stable_mosaic.version = 11 : i64} {
  func.func @_fuse_kernel(%arg0: i32, %arg1: memref<10xf32, #tpu.memory_space<smem>>, %arg2: memref<4x128xf32, #tpu.memory_space<vmem>>, %arg3: memref<4x128xf32, #tpu.memory_space<vmem>>, %arg4: memref<4x128xf32, #tpu.memory_space<vmem>>, %arg5: memref<4x128xf32, #tpu.memory_space<vmem>>, %arg6: memref<4x128xf32, #tpu.memory_space<vmem>>, %arg7: memref<4x128xf32, #tpu.memory_space<vmem>>, %arg8: memref<4x128xf32, #tpu.memory_space<vmem>>) attributes {dimension_semantics = [#tpu.dimension_semantics<parallel>], iteration_bounds = array<i64: 1>, scalar_prefetch = 0 : i64, scratch_operands = 0 : i64, tpu.core_type = #tpu.core_type<tc>, window_params = [{transform_indices = @transform_0, window_bounds = array<i64: 10>}, {transform_indices = @transform_1, window_bounds = array<i64: 4, 128>}, {transform_indices = @transform_2, window_bounds = array<i64: 4, 128>}, {transform_indices = @transform_3, window_bounds = array<i64: 4, 128>}, {transform_indices = @transform_4, window_bounds = array<i64: 4, 128>}, {transform_indices = @transform_5, window_bounds = array<i64: 4, 128>}, {transform_indices = @transform_6, window_bounds = array<i64: 4, 128>}, {transform_indices = @transform_7, window_bounds = array<i64: 4, 128>}]} {
    %c0 = arith.constant 0 : index
    %c0_0 = arith.constant 0 : index
    %0 = vector.load %arg2[%c0, %c0_0] : memref<4x128xf32, #tpu.memory_space<vmem>>, vector<4x128xf32>
    %c0_1 = arith.constant 0 : index
    %c0_2 = arith.constant 0 : index
    %1 = vector.load %arg3[%c0_1, %c0_2] : memref<4x128xf32, #tpu.memory_space<vmem>>, vector<4x128xf32>
    %c0_3 = arith.constant 0 : index
    %c0_4 = arith.constant 0 : index
    %2 = vector.load %arg4[%c0_3, %c0_4] : memref<4x128xf32, #tpu.memory_space<vmem>>, vector<4x128xf32>
    %c0_5 = arith.constant 0 : index
    %c0_6 = arith.constant 0 : index
    %3 = vector.load %arg5[%c0_5, %c0_6] : memref<4x128xf32, #tpu.memory_space<vmem>>, vector<4x128xf32>
    %c0_7 = arith.constant 0 : index
    %c0_8 = arith.constant 0 : index
    %4 = vector.load %arg6[%c0_7, %c0_8] : memref<4x128xf32, #tpu.memory_space<vmem>>, vector<4x128xf32>
    %c0_9 = arith.constant 0 : index
    %5 = memref.load %arg1[%c0_9] : memref<10xf32, #tpu.memory_space<smem>>
    %c1 = arith.constant 1 : index
    %6 = memref.load %arg1[%c1] : memref<10xf32, #tpu.memory_space<smem>>
    %c2 = arith.constant 2 : index
    %7 = memref.load %arg1[%c2] : memref<10xf32, #tpu.memory_space<smem>>
    %c3 = arith.constant 3 : index
    %8 = memref.load %arg1[%c3] : memref<10xf32, #tpu.memory_space<smem>>
    %c4 = arith.constant 4 : index
    %9 = memref.load %arg1[%c4] : memref<10xf32, #tpu.memory_space<smem>>
    %c5 = arith.constant 5 : index
    %10 = memref.load %arg1[%c5] : memref<10xf32, #tpu.memory_space<smem>>
    %c6 = arith.constant 6 : index
    %11 = memref.load %arg1[%c6] : memref<10xf32, #tpu.memory_space<smem>>
    %c7 = arith.constant 7 : index
    %12 = memref.load %arg1[%c7] : memref<10xf32, #tpu.memory_space<smem>>
    %c8 = arith.constant 8 : index
    %13 = memref.load %arg1[%c8] : memref<10xf32, #tpu.memory_space<smem>>
    %c9 = arith.constant 9 : index
    %14 = memref.load %arg1[%c9] : memref<10xf32, #tpu.memory_space<smem>>
    %15 = vector.broadcast %5 : f32 to vector<4x128xf32>
    %16 = arith.mulf %15, %0 : vector<4x128xf32>
    %17 = vector.broadcast %6 : f32 to vector<4x128xf32>
    %18 = arith.mulf %17, %1 : vector<4x128xf32>
    %19 = arith.addf %16, %18 : vector<4x128xf32>
    %20 = vector.broadcast %7 : f32 to vector<4x128xf32>
    %21 = arith.mulf %20, %2 : vector<4x128xf32>
    %22 = arith.addf %19, %21 : vector<4x128xf32>
    %23 = vector.broadcast %8 : f32 to vector<4x128xf32>
    %24 = arith.mulf %23, %3 : vector<4x128xf32>
    %25 = arith.addf %22, %24 : vector<4x128xf32>
    %26 = vector.broadcast %9 : f32 to vector<4x128xf32>
    %27 = arith.addf %25, %26 : vector<4x128xf32>
    %c0_10 = arith.constant 0 : index
    %c0_11 = arith.constant 0 : index
    %28 = vector.load %arg7[%c0_10, %c0_11] : memref<4x128xf32, #tpu.memory_space<vmem>>, vector<4x128xf32>
    tpu.vector_store %arg7[%c0_10, %c0_11], %27 {strides = array<i32>} : memref<4x128xf32, #tpu.memory_space<vmem>>, vector<4x128xf32>,
    %29 = vector.broadcast %10 : f32 to vector<4x128xf32>
    %30 = arith.mulf %29, %1 : vector<4x128xf32>
    %31 = vector.broadcast %11 : f32 to vector<4x128xf32>
    %32 = arith.mulf %31, %2 : vector<4x128xf32>
    %33 = arith.addf %30, %32 : vector<4x128xf32>
    %34 = vector.broadcast %12 : f32 to vector<4x128xf32>
    %35 = arith.mulf %34, %3 : vector<4x128xf32>
    %36 = arith.addf %33, %35 : vector<4x128xf32>
    %37 = vector.broadcast %13 : f32 to vector<4x128xf32>
    %38 = arith.mulf %37, %4 : vector<4x128xf32>
    %39 = arith.addf %36, %38 : vector<4x128xf32>
    %40 = vector.broadcast %14 : f32 to vector<4x128xf32>
    %41 = arith.addf %39, %40 : vector<4x128xf32>
    %c0_12 = arith.constant 0 : index
    %c0_13 = arith.constant 0 : index
    %42 = vector.load %arg8[%c0_12, %c0_13] : memref<4x128xf32, #tpu.memory_space<vmem>>, vector<4x128xf32>
    tpu.vector_store %arg8[%c0_12, %c0_13], %41 {strides = array<i32>} : memref<4x128xf32, #tpu.memory_space<vmem>>, vector<4x128xf32>,
    return
  }
  func.func @transform_0(%arg0: i32) -> i32 {
    %c0_i32 = arith.constant 0 : i32
    %c0_i32_0 = arith.constant 0 : i32
    return %c0_i32 : i32
  }
  func.func @transform_1(%arg0: i32) -> (i32, i32) {
    %c0_i32 = arith.constant 0 : i32
    %c0_i32_0 = arith.constant 0 : i32
    return %arg0, %c0_i32 : i32, i32
  }
  func.func @transform_2(%arg0: i32) -> (i32, i32) {
    %c0_i32 = arith.constant 0 : i32
    %c0_i32_0 = arith.constant 0 : i32
    return %arg0, %c0_i32 : i32, i32
  }
  func.func @transform_3(%arg0: i32) -> (i32, i32) {
    %c0_i32 = arith.constant 0 : i32
    %c0_i32_0 = arith.constant 0 : i32
    return %arg0, %c0_i32 : i32, i32
  }
  func.func @transform_4(%arg0: i32) -> (i32, i32) {
    %c0_i32 = arith.constant 0 : i32
    %c0_i32_0 = arith.constant 0 : i32
    return %arg0, %c0_i32 : i32, i32
  }
  func.func @transform_5(%arg0: i32) -> (i32, i32) {
    %c0_i32 = arith.constant 0 : i32
    %c0_i32_0 = arith.constant 0 : i32
    return %arg0, %c0_i32 : i32, i32
  }
  func.func @transform_6(%arg0: i32) -> (i32, i32) {
    %c0_i32 = arith.constant 0 : i32
    %c0_i32_0 = arith.constant 0 : i32
    return %arg0, %c0_i32 : i32, i32
  }
  func.func @transform_7(%arg0: i32) -> (i32, i32) {
    %c0_i32 = arith.constant 0 : i32
    %c0_i32_0 = arith.constant 0 : i32
    return %arg0, %c0_i32 : i32, i32
  }
}

</mosaic_0001>

<llo_original>
// kernel: _cobnet_fuse_impl.1
$region0: #{_cobnet_fuse_impl.1}
  #allocation0 [shape = 'u32[]', space=smem, size = 0x4, offset = 0x4, fixed_abs, tag = 'smem constant byte address 0x4 - core index']
  #allocation1 [shape = 'u32[72,128]{1,0:T(1,128)}', space=vmem, size = 0x9000, scoped, tag = 'internal scratch']
  %s0 = inlined_call_operand.vmem [shape: f32[10], index: 0, kind: input, shape index: {}]
  %s1 = inlined_call_operand.vmem [shape: f32[4,128], index: 1, kind: input, shape index: {}]
  %s2 = inlined_call_operand.vmem [shape: f32[4,128], index: 2, kind: input, shape index: {}]
  %s3 = inlined_call_operand.vmem [shape: f32[4,128], index: 3, kind: input, shape index: {}]
  %s4 = inlined_call_operand.vmem [shape: f32[4,128], index: 4, kind: input, shape index: {}]
  %s5 = inlined_call_operand.vmem [shape: f32[4,128], index: 5, kind: input, shape index: {}]
  %s6 = inlined_call_operand.vmem [shape: f32[4,128], index: 6, kind: output, shape index: {0}]
  %s7 = inlined_call_operand.vmem [shape: f32[4,128], index: 7, kind: output, shape index: {1}]
  %8 = xla_tuple %s6, %s7
  %s9 = sld [smem:[#allocation0]]
  $region46: #{_cobnet_fuse_impl.1} parent=0
    _
  %s11 = ssub.s32 1, %s9
  %s12 = scalar_select 0, %s11, %s9
  $region1: #{_cobnet_fuse_impl.1} parent=0
    #allocation2 [shape = 'u8[512]{0}', space=smem, size = 0x200, scoped, tag = 'input window, operand 0, single buffered']
    #allocation3 [shape = 's32[1]{0}', space=sflag, size = 0x4, scoped, tag = 'scoped memory for _cobnet_fuse_impl.1']
    %13 = vsyncpa [#allocation3], 0
    // Predicated region
    $region2: #{_cobnet_fuse_impl.1} parent=1 // pred_check
      _
    $region3: #{_cobnet_fuse_impl.1} parent=1 // pred_check_branch
      %15 = sbr.rel (0) target = $region5
    $region4: #{_cobnet_fuse_impl.1} parent=1 // pred_region
      %17 = vsyncadd [#allocation3], 0
      %s19 = sshll.u32 %s0, 4
      %s20 = int_to_ptr.vmem [resolvable:$true] %s19
      %22 = dma.vmem_to_smem %s20, 16, [#allocation2], [#allocation3]
    $region5: #{_cobnet_fuse_impl.1} parent=1 // pred_fallthru
      _
    // Predicated region
    $region6: #{_cobnet_fuse_impl.1} parent=1 // pred_check
      _
    $region7: #{_cobnet_fuse_impl.1} parent=1 // pred_check_branch
      %24 = sbr.rel (0) target = $region9
    $region8: #{_cobnet_fuse_impl.1} parent=1 // pred_region
      _
    $region9: #{_cobnet_fuse_impl.1} parent=1 // pred_fallthru
      _
    // Predicated region
    $region10: #{_cobnet_fuse_impl.1} parent=1 // pred_check
      _
    $region11: #{_cobnet_fuse_impl.1} parent=1 // pred_check_branch
      %26 = sbr.rel (0) target = $region13
    $region12: #{_cobnet_fuse_impl.1} parent=1 // pred_region
      _
    $region13: #{_cobnet_fuse_impl.1} parent=1 // pred_fallthru
      _
    // Predicated region
    $region14: #{_cobnet_fuse_impl.1} parent=1 // pred_check
      _
    $region15: #{_cobnet_fuse_impl.1} parent=1 // pred_check_branch
      %28 = sbr.rel (0) target = $region17
    $region16: #{_cobnet_fuse_impl.1} parent=1 // pred_region
      _
    $region17: #{_cobnet_fuse_impl.1} parent=1 // pred_fallthru
      _
    // Predicated region
    $region18: #{_cobnet_fuse_impl.1} parent=1 // pred_check
      _
    $region19: #{_cobnet_fuse_impl.1} parent=1 // pred_check_branch
      %30 = sbr.rel (0) target = $region21
    $region20: #{_cobnet_fuse_impl.1} parent=1 // pred_region
      _
    $region21: #{_cobnet_fuse_impl.1} parent=1 // pred_fallthru
      _
    // Predicated region
    $region22: #{_cobnet_fuse_impl.1} parent=1 // pred_check
      _
    $region23: #{_cobnet_fuse_impl.1} parent=1 // pred_check_branch
      %32 = sbr.rel (0) target = $region25
    $region24: #{_cobnet_fuse_impl.1} parent=1 // pred_region
      _
    $region25: #{_cobnet_fuse_impl.1} parent=1 // pred_fallthru
      _
    // Predicated region
    $region26: #{_cobnet_fuse_impl.1} parent=1 // pred_check
      _
    $region27: #{_cobnet_fuse_impl.1} parent=1 // pred_check_branch
      %34 = sbr.rel (0) target = $region29
    $region28: #{_cobnet_fuse_impl.1} parent=1 // pred_region
      %36 = dma.done [#allocation3], 16
    $region29: #{_cobnet_fuse_impl.1} parent=1 // pred_fallthru
      _
    %37 = sfence
    %v38 = vld [vmem:[%s1] sm:$0xf]
    %v39 = vld [vmem:[%s2] sm:$0xf]
    %v40 = vld [vmem:[%s3] sm:$0xf]
    %v41 = vld [vmem:[%s4] sm:$0xf]
    %v42 = vld [vmem:[%s5] sm:$0xf]
    %s43 = sld [smem:[#allocation2]]
    %s44 = sld [smem:[#allocation2 + $0x1]]
    %s45 = sld [smem:[#allocation2 + $0x2]]
    %s46 = sld [smem:[#allocation2 + $0x3]]
    %s47 = sld [smem:[#allocation2 + $0x4]]
    %s48 = sld [smem:[#allocation2 + $0x5]]
    %s49 = sld [smem:[#allocation2 + $0x6]]
    %s50 = sld [smem:[#allocation2 + $0x7]]
    %s51 = sld [smem:[#allocation2 + $0x8]]
    %s52 = sld [smem:[#allocation2 + $0x9]]
    %v53 = vstv %s43
    %v54 = vmul.f32 %v53, %v38
    %v55 = vstv %s44
    %v56 = vmul.f32 %v55, %v39
    %v57 = vadd.f32 %v54, %v56
    %v58 = vstv %s45
    %v59 = vmul.f32 %v58, %v40
    %v60 = vadd.f32 %v57, %v59
    %v61 = vstv %s46
    %v62 = vmul.f32 %v61, %v41
    %v63 = vadd.f32 %v60, %v62
    %v64 = vstv %s47
    %v65 = vadd.f32 %v63, %v64
    %66 = vst [vmem:[%s6] sm:$0xf] %v65
    %v67 = vstv %s48
    %v68 = vmul.f32 %v67, %v39
    %v69 = vstv %s49
    %v70 = vmul.f32 %v69, %v40
    %v71 = vadd.f32 %v68, %v70
    %v72 = vstv %s50
    %v73 = vmul.f32 %v72, %v41
    %v74 = vadd.f32 %v71, %v73
    %v75 = vstv %s51
    %v76 = vmul.f32 %v75, %v42
    %v77 = vadd.f32 %v74, %v76
    %v78 = vstv %s52
    %v79 = vadd.f32 %v77, %v78
    %80 = vst [vmem:[%s7] sm:$0xf] %v79
    // Predicated region
    $region30: #{_cobnet_fuse_impl.1} parent=1 // pred_check
      _
    $region31: #{_cobnet_fuse_impl.1} parent=1 // pred_check_branch
      %82 = sbr.rel (0) target = $region33
    $region32: #{_cobnet_fuse_impl.1} parent=1 // pred_region
      _
    $region33: #{_cobnet_fuse_impl.1} parent=1 // pred_fallthru
      _
    // Predicated region
    $region34: #{_cobnet_fuse_impl.1} parent=1 // pred_check
      _
    $region35: #{_cobnet_fuse_impl.1} parent=1 // pred_check_branch
      %84 = sbr.rel (0) target = $region37
    $region36: #{_cobnet_fuse_impl.1} parent=1 // pred_region
      _
    $region37: #{_cobnet_fuse_impl.1} parent=1 // pred_fallthru
      _
    // Predicated region
    $region38: #{_cobnet_fuse_impl.1} parent=1 // pred_check
      _
    $region39: #{_cobnet_fuse_impl.1} parent=1 // pred_check_branch
      %86 = sbr.rel (0) target = $region41
    $region40: #{_cobnet_fuse_impl.1} parent=1 // pred_region
      _
    $region41: #{_cobnet_fuse_impl.1} parent=1 // pred_fallthru
      _
    // Predicated region
    $region42: #{_cobnet_fuse_impl.1} parent=1 // pred_check
      _
    $region43: #{_cobnet_fuse_impl.1} parent=1 // pred_check_branch
      %88 = sbr.rel (0) target = $region45
    $region44: #{_cobnet_fuse_impl.1} parent=1 // pred_region
      _
    $region45: #{_cobnet_fuse_impl.1} parent=1 // pred_fallthru
      _
    %89 = vsyncpa [#allocation3], 1

</llo_original>
